<compile_context>
chip_gen: v7x
topology: tpu7x:2x2x1
jax: 0.10.0
libtpu: 0.0.40
codegen_flags: <defaults>
</compile_context>

<pallas_src>
import numpy as np
import jax
import jax.numpy as jnp
from jax.experimental import pallas as pl
from jax.experimental.pallas import tpu as pltpu


# ----------------------------------------------------------------------------
# db6 filter bank (pywt convention).
# ----------------------------------------------------------------------------
_DB6_REC_LO = np.array([
    0.11154074335008017, 0.4946238903983854, 0.7511339080215775,
    0.3152503517092432, -0.22626469396516913, -0.12976686756709563,
    0.09750160558707936, 0.02752286553001629, -0.031582039318031156,
    0.0005538422009938016, 0.004777257511010651, -0.00107730108499558,
], dtype=np.float64)


def _db6_filters():
    rec_lo = _DB6_REC_LO
    dec_lo = rec_lo[::-1].copy()
    rec_hi = np.array([(-1.0) ** i * dec_lo[i] for i in range(len(dec_lo))])
    dec_hi = rec_hi[::-1].copy()
    return dec_lo, dec_hi, rec_lo, rec_hi


def _reflect(idx, minx, maxx):
    # Same 'reflect' used by pytorch_wavelets for mode='symmetric'.
    rng = maxx - minx
    rng2 = 2.0 * rng
    mod = np.fmod(idx - minx, rng2)
    mod = np.where(mod < 0, mod + rng2, mod)
    out = np.where(mod >= rng, rng2 - mod, mod) + minx
    return np.round(out).astype(np.int64)


def _afb_matrices(n, dec_lo, dec_hi):
    """Analysis (one DWT level) as y_lo = x @ A_lo, y_hi = x @ A_hi."""
    L = len(dec_lo)
    outsize = (n + L - 1) // 2                       # pywt.dwt_coeff_len, symmetric
    p = 2 * (outsize - 1) - n + L                    # total symmetric pad
    pad_l, pad_r = p // 2, (p + 1) // 2
    xe = _reflect(np.arange(-pad_l, n + pad_r, dtype=np.float64), -0.5, n - 0.5)
    n_pad = n + p
    P = np.zeros((n_pad, n))
    P[np.arange(n_pad), xe] = 1.0                    # x_pad = P @ x
    h_lo_rev = dec_lo[::-1]                          # conv2d = cross-correlation
    h_hi_rev = dec_hi[::-1]
    C_lo = np.zeros((outsize, n_pad))
    C_hi = np.zeros((outsize, n_pad))
    for m in range(outsize):
        C_lo[m, 2 * m:2 * m + L] = h_lo_rev
        C_hi[m, 2 * m:2 * m + L] = h_hi_rev
    A_lo = (C_lo @ P).T
    A_hi = (C_hi @ P).T
    return A_lo, A_hi, outsize


def _sfb_matrices(n_in, rec_lo, rec_hi):
    """Synthesis (one IDWT level) as y = lo @ S_lo + hi @ S_hi."""
    L = len(rec_lo)
    n_out = 2 * n_in - L + 2                         # conv_transpose, padding = L-2
    S_lo = np.zeros((n_in, n_out))
    S_hi = np.zeros((n_in, n_out))
    for m in range(n_in):
        for t in range(n_out):
            k = t + (L - 2) - 2 * m
            if 0 <= k < L:
                S_lo[m, t] = rec_lo[k]
                S_hi[m, t] = rec_hi[k]
    return S_lo, S_hi, n_out


# ----------------------------------------------------------------------------
# Weight-independent operators (composed once, in float64).
# ----------------------------------------------------------------------------
def build_wavelet_operators(n, j_levels):
    dec_lo, dec_hi, rec_lo, rec_hi = _db6_filters()

    # per-level analysis
    a_lo, a_hi, lengths = [], [], [n]
    cur = n
    for _ in range(j_levels):
        A_lo, A_hi, out = _afb_matrices(cur, dec_lo, dec_hi)
        a_lo.append(A_lo)
        a_hi.append(A_hi)
        lengths.append(out)
        cur = out
    modes1 = lengths[-1]

    # per-level synthesis; s_*[lvl-1] acts on coefficients of length lengths[lvl]
    s_lo, s_hi = [], []
    for lvl in range(1, j_levels + 1):
        S_lo, S_hi, _ = _sfb_matrices(lengths[lvl], rec_lo, rec_hi)
        s_lo.append(S_lo)
        s_hi.append(S_hi)

    # composite analysis projections: x -> each band
    proj = np.eye(n)
    proj_hi = []                                     # finest -> coarsest detail
    for lvl in range(j_levels):
        proj_hi.append(proj @ a_hi[lvl])             # (n, lengths[lvl+1])
        proj = proj @ a_lo[lvl]
    proj_lo = proj                                   # (n, modes1)

    # composite synthesis: band coeffs -> final length-n signal
    def chain_to_output(mat, lvl):
        # columns index the running signal right after the level-`lvl` synthesis
        # matmul; apply remaining low-pass levels lvl-1, ..., 1 with the
        # pytorch_wavelets 'unpad' truncation before each matmul.
        for nxt in range(lvl - 1, 0, -1):
            mat = mat[:, :lengths[nxt]] @ s_lo[nxt - 1]
        return mat

    rec_lo_coarse = chain_to_output(s_lo[j_levels - 1], j_levels)        # (modes1, n)
    rec_hi_all = [chain_to_output(s_hi[lvl - 1], lvl)                    # (lengths[lvl], n)
                  for lvl in range(1, j_levels + 1)]

    # identity path: detail bands 1..J-1 are NOT channel-mixed (channel-preserving)
    m_id = np.zeros((n, n))
    for lvl in range(1, j_levels):
        m_id += proj_hi[lvl - 1] @ rec_hi_all[lvl - 1]

    # channel-mixed path: approximation (lo_J) and coarsest detail (hi_J)
    w_ana_mix = np.concatenate([proj_lo, proj_hi[j_levels - 1]], axis=1)       # (n, 2m)
    w_syn_mix = np.concatenate([rec_lo_coarse, rec_hi_all[j_levels - 1]], axis=0)  # (2m, n)

    return {
        "modes1": modes1,
        "w_ana": jnp.asarray(w_ana_mix, jnp.float32),   # (n, 2*modes1)
        "w_syn": jnp.asarray(w_syn_mix, jnp.float32),   # (2*modes1, n)
        "m_id": jnp.asarray(m_id, jnp.float32),         # (n, n)
        # per-level matrices for the pure-JAX reference (finest-first analysis,
        # coarsest-first synthesis, matching the original level-by-level code)
        "analysis": [(jnp.asarray(al, jnp.float32), jnp.asarray(ah, jnp.float32))
                     for al, ah in zip(a_lo, a_hi)],
        "synthesis": [(jnp.asarray(s_lo[lvl - 1], jnp.float32),
                       jnp.asarray(s_hi[lvl - 1], jnp.float32))
                      for lvl in range(j_levels, 0, -1)],
    }


# ----------------------------------------------------------------------------
# Pallas kernel: one batch tile of the fused forward = one MXU matmul.
# ----------------------------------------------------------------------------
def _waveconv1d_kernel(x_ref, w_ref, o_ref):
    # x_ref: (B_tile, Cin*N)   w_ref: (Cin*N, Cout*N)   o_ref: (B_tile, Cout*N)
    o_ref[...] = jnp.dot(x_ref[...], w_ref[...],
                         preferred_element_type=jnp.float32)


def wave_conv1d_forward(x, weights1, ops, *, b_tile=128):
    b, cin, n = x.shape
    cin_w, cout, modes1_w = weights1.shape
    assert cin == cin_w and cin == cout, "WNO layer requires in==out channels"
    modes1 = ops["modes1"]
    assert modes1 == modes1_w
    w_ana, w_syn, m_id = ops["w_ana"], ops["w_syn"], ops["m_id"]

    # --- per-call composition (weights1 is trainable): fold channel mixing,
    #     synthesis and identity path into one (Cin*N, Cout*N) MXU operator.
    #     W_full[(i,n),(o,m)] = sum_k w_ana[n,k]*w_mix[i,o,k]*w_syn[k,m]
    #                           + delta(i,o)*m_id[n,m]
    w1 = weights1.astype(jnp.float32)
    w_mix = jnp.concatenate([w1, w1], axis=2)                  # lo_J and hi_J share weights1
    mixed_op = jnp.einsum('nk,iok,km->inom', w_ana, w_mix, w_syn)
    eye = jnp.eye(cin, cout, dtype=jnp.float32)
    full_op = mixed_op + eye[:, None, :, None] * m_id[None, :, None, :]
    k_dim, m_out = cin * n, cout * n
    w_full = full_op.reshape(k_dim, m_out)

    # --- batch tiling: flatten (Cin, N) into the matmul K dim, tile batch on M.
    bt = max(8, min(b_tile, -(-b // 8) * 8))                   # sublane-aligned tile
    b_pad = -(-b // bt) * bt
    x2 = x.astype(jnp.float32).reshape(b, k_dim)
    if b_pad != b:
        x2 = jnp.pad(x2, ((0, b_pad - b), (0, 0)))
    grid = (b_pad // bt,)

    flops = 2 * b_pad * k_dim * m_out
    bytes_accessed = 4 * (b_pad * k_dim + k_dim * m_out + b_pad * m_out)
    # explicit scoped-VMEM budget: double-buffered x/out tiles + the resident
    # operator (counted twice for safety), capped at the v7x physical 64 MiB.
    vmem_need = 4 * (2 * bt * k_dim + 2 * k_dim * m_out + 2 * bt * m_out)
    vmem_limit = int(min(64 * 1024 * 1024, max(2 * vmem_need, 4 * 1024 * 1024)))

    out2 = pl.pallas_call(
        _waveconv1d_kernel,
        grid=grid,
        in_specs=[
            pl.BlockSpec((bt, k_dim), lambda i: (i, 0)),       # one batch tile / step
            pl.BlockSpec((k_dim, m_out), lambda i: (0, 0)),    # operator resident in VMEM
        ],
        out_specs=pl.BlockSpec((bt, m_out), lambda i: (i, 0)), # lane/sublane-dense store
        out_shape=jax.ShapeDtypeStruct((b_pad, m_out), jnp.float32),
        compiler_params=pltpu.CompilerParams(
            dimension_semantics=("parallel",),                 # shard batch tiles on v7x TCs
            vmem_limit_bytes=vmem_limit),
        cost_estimate=pl.CostEstimate(flops=flops, transcendentals=0,
                                      bytes_accessed=bytes_accessed),
    )(x2, w_full)

    return out2[:b].reshape(b, cout, n)


# ----------------------------------------------------------------------------
# Pure-JAX level-by-level reference (mirrors the original module's algorithm).
# ----------------------------------------------------------------------------
def wave_conv1d_reference(x, weights1, analysis_mats, synthesis_mats):
    b, cin, n = x.shape
    cur = x.reshape(b * cin, n)
    highs = []
    for a_lo, a_hi in analysis_mats:
        highs.append((cur @ a_hi).reshape(b, cin, -1))
        cur = cur @ a_lo
    x_ft = cur.reshape(b, cin, -1)
    out_ft = jnp.einsum('bix,iox->box', x_ft, weights1)
    highs[-1] = jnp.einsum('bix,iox->box', highs[-1], weights1)
    x0 = out_ft
    for (s_lo, s_hi), h in zip(synthesis_mats, highs[::-1]):
        if x0.shape[-1] > h.shape[-1]:
            x0 = x0[..., : h.shape[-1]]               # 'unpad' as in pytorch_wavelets
        c = x0.shape[1]
        n_in = x0.shape[-1]
        rec = (x0.reshape(b * c, n_in) @ s_lo) + (h.reshape(b * c, n_in) @ s_hi)
        x0 = rec.reshape(b, c, -1)
    return x0


if __name__ == "__main__":
    # B=64 with a 32-batch tile -> grid=(2,) (even tile count for v7x megacore);
    # each step is a (32, 256) @ (256, 256) MXU matmul with dense stores.
    B, Cin, Cout, N, J = 64, 4, 4, 64, 3
    ops = build_wavelet_operators(N, J)               # modes1 = 17 for N=64, db6, J=3
    modes1 = ops["modes1"]

    key = jax.random.PRNGKey(0)
    kx, kw = jax.random.split(key)
    x = jax.random.normal(kx, (B, Cin, N), dtype=jnp.float32)
    scale = 1.0 / (Cin * Cout)
    weights1 = scale * jax.random.uniform(kw, (Cin, Cout, modes1), dtype=jnp.float32)

    out = wave_conv1d_forward(x, weights1, ops, b_tile=32)
    out = jax.block_until_ready(out)

    ref = wave_conv1d_reference(x, weights1, ops["analysis"], ops["synthesis"])
    assert out.shape == ref.shape == (B, Cout, N)
    np.testing.assert_allclose(np.asarray(out), np.asarray(ref), rtol=5e-4, atol=5e-4)
    print("KERNEL_OK")
</pallas_src>

<mosaic_0001>
module attributes {stable_mosaic.version = 11 : i64} {
  func.func @_waveconv1d_kernel(%arg0: i32, %arg1: memref<32x256xf32, #tpu.memory_space<vmem>>, %arg2: memref<256x256xf32, #tpu.memory_space<vmem>>, %arg3: memref<32x256xf32, #tpu.memory_space<vmem>>) attributes {dimension_semantics = [#tpu.dimension_semantics<parallel>], iteration_bounds = array<i64: 2>, scalar_prefetch = 0 : i64, scratch_operands = 0 : i64, tpu.core_type = #tpu.core_type<tc>, window_params = [{transform_indices = @transform_0, window_bounds = array<i64: 32, 256>}, {pipeline_mode = #tpu.pipeline_mode<synchronous>, transform_indices = @transform_1, window_bounds = array<i64: 256, 256>}, {transform_indices = @transform_2, window_bounds = array<i64: 32, 256>}]} {
    %c0 = arith.constant 0 : index
    %c0_0 = arith.constant 0 : index
    %0 = vector.load %arg1[%c0, %c0_0] : memref<32x256xf32, #tpu.memory_space<vmem>>, vector<32x256xf32>
    %c0_1 = arith.constant 0 : index
    %c0_2 = arith.constant 0 : index
    %1 = vector.load %arg2[%c0_1, %c0_2] : memref<256x256xf32, #tpu.memory_space<vmem>>, vector<256x256xf32>
    %cst = arith.constant dense<0.000000e+00> : vector<32x256xf32>
    %2 = tpu.matmul %0, %1, %cst {dimension_numbers = #tpu.dot_dimension_numbers<[1], [0], [0], [1], [0, 0, 1, 1], [], []>} : vector<32x256xf32>, vector<256x256xf32>, vector<32x256xf32> -> vector<32x256xf32>
    %c0_3 = arith.constant 0 : index
    %c0_4 = arith.constant 0 : index
    %3 = vector.load %arg3[%c0_3, %c0_4] : memref<32x256xf32, #tpu.memory_space<vmem>>, vector<32x256xf32>
    tpu.vector_store %arg3[%c0_3, %c0_4], %2 {strides = array<i32>} : memref<32x256xf32, #tpu.memory_space<vmem>>, vector<32x256xf32>,
    return
  }
  func.func @transform_0(%arg0: i32) -> (i32, i32) {
    %c0_i32 = arith.constant 0 : i32
    %c0_i32_0 = arith.constant 0 : i32
    return %arg0, %c0_i32 : i32, i32
  }
  func.func @transform_1(%arg0: i32) -> (i32, i32) {
    %c0_i32 = arith.constant 0 : i32
    %c0_i32_0 = arith.constant 0 : i32
    %c0_i32_1 = arith.constant 0 : i32
    return %c0_i32, %c0_i32_0 : i32, i32
  }
  func.func @transform_2(%arg0: i32) -> (i32, i32) {
    %c0_i32 = arith.constant 0 : i32
    %c0_i32_0 = arith.constant 0 : i32
    return %arg0, %c0_i32 : i32, i32
  }
}

</mosaic_0001>

<llo_original>
// kernel: tpu_custom_call.1
$region0: #{tpu_custom_call.1}
  #allocation0 [shape = 'u32[]', space=smem, size = 0x4, offset = 0x4, fixed_abs, tag = 'smem constant byte address 0x4 - core index']
  #allocation1 [shape = 'u32[144,128]{1,0:T(1,128)}', space=vmem, size = 0x12000, scoped, tag = 'internal scratch']
  %s0 = inlined_call_operand.hbm [shape: f32[64,256], index: 0, kind: input, shape index: {}]
  %s1 = inlined_call_operand.hbm [shape: f32[256,256], index: 1, kind: input, shape index: {}]
  %s2 = inlined_call_operand.hbm [shape: f32[64,256], index: 2, kind: output, shape index: {}]
  %s3 = sld [smem:[#allocation0]]
  $region49: #{tpu_custom_call.1} parent=0
    _
  %s5 = ssub.s32 1, %s3
  %s6 = scalar_select 0, %s5, %s3
  $region1: #{tpu_custom_call.1} parent=0
    #allocation2 [shape = 'u8[65536]{0}', space=vmem, size = 0x10000, scoped, tag = 'input window, operand 0']
    #allocation3 [shape = 's32[2]{0}', space=sflag, size = 0x8, scoped, tag = 'scoped memory for tpu_custom_call.1']
    #allocation4 [shape = 's32[2]{0}', space=sflag, size = 0x8, scoped, tag = 'scoped memory for tpu_custom_call.1']
    #allocation5 [shape = 'u8[262144]{0}', space=vmem, size = 0x40000, scoped, tag = 'input window, operand 1, single buffered']
    #allocation6 [shape = 's32[1]{0}', space=sflag, size = 0x4, scoped, tag = 'scoped memory for tpu_custom_call.1']
    #allocation7 [shape = 'u8[65536]{0}', space=vmem, size = 0x10000, scoped, tag = 'output window, operand 0']
    %7 = vsyncpa [#allocation3], 0
    %s8 = scalar_lea.sflag [#allocation3], 1
    %9 = vsyncpa %s8, 0
    %10 = vsyncpa [#allocation6], 0
    %11 = vsyncpa [#allocation4], 0
    %s12 = scalar_lea.sflag [#allocation4], 1
    %13 = vsyncpa %s12, 0
    loop: start=0, step=1, limit=4
    $region2: #{tpu_custom_call.1} parent=1 // loop_pre_header
      _
    $region3: #{tpu_custom_call.1} parent=1 // loop_header
      %s15 = sphi 0, %s19
      %p16 = scmp.ge.s32.totalorder %s15, 4
      %s25 = sphi 0, %s27
      %s28 = sphi 0, %s25
      %s29 = sphi 0, %s28
      %s45 = sphi 0, %s29
      %s49 = sphi 0, %s49
      %s51 = sphi 0, %s49
      %s52 = sphi 0, %s51
      %s66 = sphi 0, %s52
      %s72 = sphi 0, %s74
      %s75 = sphi 0, %s72
      %s76 = sphi 0, %s75
      %s92 = sphi 0, %s76
    $region4: #{tpu_custom_call.1} parent=1 // loop_header_branch
      %18 = sbr.rel (%p16) target = $region8
    $region5: #{tpu_custom_call.1} parent=1 // loop_body
      %s20 = ssub.s32 %s15, 1
      %s21 = ssub.s32 %s15, 2
      %s22 = sadd.s32 %s15, 1
      %s23 = ssub.s32 %s15, %s22
      %p24 = scmp.eq.s32.totalorder %s23, 0
      %s26 = sadd.s32 %s25, 1
      %s27 = scalar_select %p24, %s25, %s26
      %p30 = pneg %p24
      %p31 = scmp.eq.s32.totalorder %s15, 1
      %p32 = por %p30, %p31
      %p33 = scmp.ne.s32.totalorder %s25, %s28
      %p34 = scmp.eq.s32.totalorder %s15, 0
      %p35 = por %p33, %p34
      %p36 = scmp.ne.s32.totalorder %s25, %s28
      %p37 = scmp.eq.s32.totalorder %s20, 1
      %p38 = por %p36, %p37
      %p39 = scmp.ne.s32.totalorder %s28, %s29
      %p40 = scmp.eq.s32.totalorder %s20, 0
      %p41 = por %p39, %p40
      %p42 = scmp.ne.s32.totalorder %s28, %s29
      %p43 = scmp.eq.s32.totalorder %s21, 1
      %p44 = por %p42, %p43
      %p46 = scmp.ne.s32.totalorder %s29, %s45
      %p47 = scmp.eq.s32.totalorder %s21, 0
      %p48 = por %p46, %p47
      %s50 = sadd.s32 %s49, 1
      %p53 = scmp.eq.s32.totalorder %s15, 1
      %p54 = scmp.ne.s32.totalorder %s49, %s51
      %p55 = scmp.eq.s32.totalorder %s15, 0
      %p56 = por %p54, %p55
      %p57 = scmp.ne.s32.totalorder %s49, %s51
      %p58 = scmp.eq.s32.totalorder %s20, 1
      %p59 = por %p57, %p58
      %p60 = scmp.ne.s32.totalorder %s51, %s52
      %p61 = scmp.eq.s32.totalorder %s20, 0
      %p62 = por %p60, %p61
      %p63 = scmp.ne.s32.totalorder %s51, %s52
      %p64 = scmp.eq.s32.totalorder %s21, 1
      %p65 = por %p63, %p64
      %p67 = scmp.ne.s32.totalorder %s52, %s66
      %p68 = scmp.eq.s32.totalorder %s21, 0
      %p69 = por %p67, %p68
      %s70 = ssub.s32 %s15, %s22
      %p71 = scmp.eq.s32.totalorder %s70, 0
      %s73 = sadd.s32 %s72, 1
      %s74 = scalar_select %p71, %s72, %s73
      %p77 = pneg %p71
      %p78 = scmp.eq.s32.totalorder %s15, 1
      %p79 = por %p77, %p78
      %p80 = scmp.ne.s32.totalorder %s72, %s75
      %p81 = scmp.eq.s32.totalorder %s15, 0
      %p82 = por %p80, %p81
      %p83 = scmp.ne.s32.totalorder %s72, %s75
      %p84 = scmp.eq.s32.totalorder %s20, 1
      %p85 = por %p83, %p84
      %p86 = scmp.ne.s32.totalorder %s75, %s76
      %p87 = scmp.eq.s32.totalorder %s20, 0
      %p88 = por %p86, %p87
      %p89 = scmp.ne.s32.totalorder %s75, %s76
      %p90 = scmp.eq.s32.totalorder %s21, 1
      %p91 = por %p89, %p90
      %p93 = scmp.ne.s32.totalorder %s76, %s92
      %p94 = scmp.eq.s32.totalorder %s21, 0
      %p95 = por %p93, %p94
      %p96 = scmp.le.s32.totalorder 1, %s15
      %p97 = scmp.lt.s32.totalorder %s15, 3
      %p98 = pnand %p96, %p97
      %p99 = pneg %p98
      // Predicated region
      $region9: #{tpu_custom_call.1} parent=5 // pred_check
        _
      $region10: #{tpu_custom_call.1} parent=5 // pred_check_branch
        %101 = sbr.rel (%p98) target = $region12
      $region11: #{tpu_custom_call.1} parent=5 // pred_region
        %s102 = ssub.s32 %s15, 1
        // Predicated region
        $region13: #{tpu_custom_call.1} parent=11 // pred_check
          %p103 = pneg %p62
        $region14: #{tpu_custom_call.1} parent=11 // pred_check_branch
          %105 = sbr.rel (%p103) target = $region16
        $region15: #{tpu_custom_call.1} parent=11 // pred_region
          %s107 = ssub.s32 8192, 8192
          %108 = vsyncadd [#allocation6], %s107
          %s109 = sshll.u32 [#allocation5], 4
          %s110 = int_to_ptr.vmem [resolvable:$true] %s109
          %115 = dma.hbm_to_vmem [thread:$0]  %s1, 8192, %s110, [#allocation6], 256, 256, 16
        $region16: #{tpu_custom_call.1} parent=11 // pred_fallthru
          _
      $region12: #{tpu_custom_call.1} parent=5 // pred_fallthru
        _
      %p116 = scmp.lt.s32.totalorder %s15, 2
      // Predicated region
      $region17: #{tpu_custom_call.1} parent=5 // pred_check
        %p117 = pneg %p116
      $region18: #{tpu_custom_call.1} parent=5 // pred_check_branch
        %119 = sbr.rel (%p117) target = $region20
      $region19: #{tpu_custom_call.1} parent=5 // pred_region
        // Predicated region
        $region21: #{tpu_custom_call.1} parent=19 // pred_check
          %p120 = pneg %p35
        $region22: #{tpu_custom_call.1} parent=19 // pred_check_branch
          %122 = sbr.rel (%p120) target = $region24
        $region23: #{tpu_custom_call.1} parent=19 // pred_region
          %s123 = sand.u32 %s25, 1
          %s124 = scalar_lea.sflag [#allocation3], %s123
          %s125 = sand.u32 %s25, 1
          %s126 = smul.addr %s125, 64
          %s127 = scalar_lea.vmem [#allocation2], %s126
          %s128 = smul.u32 4, %s15
          %s130 = ssub.s32 1024, 1024
          %131 = vsyncadd %s124, %s130
          %s132 = smul.addr %s128, 2
          %s133 = smul.addr %s132, 128
          %s134 = scalar_lea.hbm %s0, %s133
          %s135 = sshll.u32 %s127, 4
          %s136 = int_to_ptr.vmem [resolvable:$true] %s135
          %141 = dma.hbm_to_vmem [thread:$0]  %s134, 1024, %s136, %s124, 256, 256, 16
        $region24: #{tpu_custom_call.1} parent=19 // pred_fallthru
          _
      $region20: #{tpu_custom_call.1} parent=5 // pred_fallthru
        _
      %p142 = scmp.le.s32.totalorder 1, %s15
      %p143 = scmp.lt.s32.totalorder %s15, 3
      %p144 = pnand %p142, %p143
      %p145 = pneg %p144
      // Predicated region
      $region25: #{tpu_custom_call.1} parent=5 // pred_check
        _
      $region26: #{tpu_custom_call.1} parent=5 // pred_check_branch
        %147 = sbr.rel (%p144) target = $region28
      $region27: #{tpu_custom_call.1} parent=5 // pred_region
        %s148 = ssub.s32 %s15, 1
        %s149 = sand.u32 %s28, 1
        %s150 = scalar_lea.sflag [#allocation3], %s149
        %s151 = sand.u32 %s28, 1
        %s152 = smul.addr %s151, 64
        %s153 = scalar_lea.vmem [#allocation2], %s152
        // Predicated region
        $region29: #{tpu_custom_call.1} parent=27 // pred_check
          %p154 = pneg %p41
        $region30: #{tpu_custom_call.1} parent=27 // pred_check_branch
          %156 = sbr.rel (%p154) target = $region32
        $region31: #{tpu_custom_call.1} parent=27 // pred_region
          %157 = dma.done %s150, 1024
        $region32: #{tpu_custom_call.1} parent=27 // pred_fallthru
          _
        // Predicated region
        $region33: #{tpu_custom_call.1} parent=27 // pred_check
          %p158 = pneg %p62
        $region34: #{tpu_custom_call.1} parent=27 // pred_check_branch
          %160 = sbr.rel (%p158) target = $region36
        $region35: #{tpu_custom_call.1} parent=27 // pred_region
          %161 = dma.done [#allocation6], 8192
        $region36: #{tpu_custom_call.1} parent=27 // pred_fallthru
          _
        %s162 = sand.u32 %s28, 1
        %s163 = scalar_lea.sflag [#allocation3], %s162
        %s164 = sand.u32 %s28, 1
        %s165 = smul.addr %s164, 64
        %s166 = scalar_lea.vmem [#allocation2], %s165
        %p167 = pneg %p41
        %p168 = pneg %p38
        %p169 = pneg %p62
        %p170 = pneg %p59
        %p171 = pneg %p88
        %p172 = pneg %p85
        %s173 = sand.u32 %s75, 1
        %s174 = scalar_lea.sflag [#allocation4], %s173
        %s175 = sand.u32 %s75, 1
        %s176 = smul.addr %s175, 64
        %s177 = scalar_lea.vmem [#allocation7], %s176
        %s178 = smul.u32 4, %s20
        %s179 = smul.u32 4, %s20
        %v180 = vld [vmem:[%s153] sm:$0xff]
        %v181 = vld [vmem:[%s153 + $0x8] sm:$0xff]
        %v182 = vld [vmem:[%s153 + $0x10] sm:$0xff]
        %v183 = vld [vmem:[%s153 + $0x18] sm:$0xff]
        %v184 = vld [vmem:[%s153 + $0x20] sm:$0xff]
        %v185 = vld [vmem:[%s153 + $0x28] sm:$0xff]
        %v186 = vld [vmem:[%s153 + $0x30] sm:$0xff]
        %v187 = vld [vmem:[%s153 + $0x38] sm:$0xff]
        %v188 = vld [vmem:[#allocation5] sm:$0xff]
        %v189 = vld [vmem:[#allocation5 + $0x8] sm:$0xff]
        %v190 = vld [vmem:[#allocation5 + $0x10] sm:$0xff]
        %v191 = vld [vmem:[#allocation5 + $0x18] sm:$0xff]
        %v192 = vld [vmem:[#allocation5 + $0x20] sm:$0xff]
        %v193 = vld [vmem:[#allocation5 + $0x28] sm:$0xff]
        %v194 = vld [vmem:[#allocation5 + $0x30] sm:$0xff]
        %v195 = vld [vmem:[#allocation5 + $0x38] sm:$0xff]
        %v196 = vld [vmem:[#allocation5 + $0x40] sm:$0xff]
        %v197 = vld [vmem:[#allocation5 + $0x48] sm:$0xff]
        %v198 = vld [vmem:[#allocation5 + $0x50] sm:$0xff]
        %v199 = vld [vmem:[#allocation5 + $0x58] sm:$0xff]
        %v200 = vld [vmem:[#allocation5 + $0x60] sm:$0xff]
        %v201 = vld [vmem:[#allocation5 + $0x68] sm:$0xff]
        %v202 = vld [vmem:[#allocation5 + $0x70] sm:$0xff]
        %v203 = vld [vmem:[#allocation5 + $0x78] sm:$0xff]
        %v204 = vld [vmem:[#allocation5 + $0x80] sm:$0xff]
        %v205 = vld [vmem:[#allocation5 + $0x88] sm:$0xff]
        %v206 = vld [vmem:[#allocation5 + $0x90] sm:$0xff]
        %v207 = vld [vmem:[#allocation5 + $0x98] sm:$0xff]
        %v208 = vld [vmem:[#allocation5 + $0xa0] sm:$0xff]
        %v209 = vld [vmem:[#allocation5 + $0xa8] sm:$0xff]
        %v210 = vld [vmem:[#allocation5 + $0xb0] sm:$0xff]
        %v211 = vld [vmem:[#allocation5 + $0xb8] sm:$0xff]
        %v212 = vld [vmem:[#allocation5 + $0xc0] sm:$0xff]
        %v213 = vld [vmem:[#allocation5 + $0xc8] sm:$0xff]
        %v214 = vld [vmem:[#allocation5 + $0xd0] sm:$0xff]
        %v215 = vld [vmem:[#allocation5 + $0xd8] sm:$0xff]
        %v216 = vld [vmem:[#allocation5 + $0xe0] sm:$0xff]
        %v217 = vld [vmem:[#allocation5 + $0xe8] sm:$0xff]
        %v218 = vld [vmem:[#allocation5 + $0xf0] sm:$0xff]
        %v219 = vld [vmem:[#allocation5 + $0xf8] sm:$0xff]
        %v220 = vld [vmem:[#allocation5 + $0x100] sm:$0xff]
        %v221 = vld [vmem:[#allocation5 + $0x108] sm:$0xff]
        %v222 = vld [vmem:[#allocation5 + $0x110] sm:$0xff]
        %v223 = vld [vmem:[#allocation5 + $0x118] sm:$0xff]
        %v224 = vld [vmem:[#allocation5 + $0x120] sm:$0xff]
        %v225 = vld [vmem:[#allocation5 + $0x128] sm:$0xff]
        %v226 = vld [vmem:[#allocation5 + $0x130] sm:$0xff]
        %v227 = vld [vmem:[#allocation5 + $0x138] sm:$0xff]
        %v228 = vld [vmem:[#allocation5 + $0x140] sm:$0xff]
        %v229 = vld [vmem:[#allocation5 + $0x148] sm:$0xff]
        %v230 = vld [vmem:[#allocation5 + $0x150] sm:$0xff]
        %v231 = vld [vmem:[#allocation5 + $0x158] sm:$0xff]
        %v232 = vld [vmem:[#allocation5 + $0x160] sm:$0xff]
        %v233 = vld [vmem:[#allocation5 + $0x168] sm:$0xff]
        %v234 = vld [vmem:[#allocation5 + $0x170] sm:$0xff]
        %v235 = vld [vmem:[#allocation5 + $0x178] sm:$0xff]
        %v236 = vld [vmem:[#allocation5 + $0x180] sm:$0xff]
        %v237 = vld [vmem:[#allocation5 + $0x188] sm:$0xff]
        %v238 = vld [vmem:[#allocation5 + $0x190] sm:$0xff]
        %v239 = vld [vmem:[#allocation5 + $0x198] sm:$0xff]
        %v240 = vld [vmem:[#allocation5 + $0x1a0] sm:$0xff]
        %v241 = vld [vmem:[#allocation5 + $0x1a8] sm:$0xff]
        %v242 = vld [vmem:[#allocation5 + $0x1b0] sm:$0xff]
        %v243 = vld [vmem:[#allocation5 + $0x1b8] sm:$0xff]
        %v244 = vld [vmem:[#allocation5 + $0x1c0] sm:$0xff]
        %v245 = vld [vmem:[#allocation5 + $0x1c8] sm:$0xff]
        %v246 = vld [vmem:[#allocation5 + $0x1d0] sm:$0xff]
        %v247 = vld [vmem:[#allocation5 + $0x1d8] sm:$0xff]
        %v248 = vld [vmem:[#allocation5 + $0x1e0] sm:$0xff]
        %v249 = vld [vmem:[#allocation5 + $0x1e8] sm:$0xff]
        %v250 = vld [vmem:[#allocation5 + $0x1f0] sm:$0xff]
        %v251 = vld [vmem:[#allocation5 + $0x1f8] sm:$0xff]
        %252 = vmatprep.subr.mxu0 %v189
        %253 = vmatpush1.msra.mxu0 %v188
        %254 = vmatprep.subr.mxu0 %v191
        %255 = vmatpush1.msra.mxu0 %v190
        %256 = vmatprep.subr.mxu0 %v193
        %257 = vmatpush1.msra.mxu0 %v192
        %258 = vmatprep.subr.mxu0 %v195
        %259 = vmatpush1.msra.mxu0 %v194
        %260 = vmatprep.subr.mxu0 %v197
        %261 = vmatpush1.msra.mxu0 %v196
        %262 = vmatprep.subr.mxu0 %v199
        %263 = vmatpush1.msra.mxu0 %v198
        %264 = vmatprep.subr.mxu0 %v201
        %265 = vmatpush1.msra.mxu0 %v200
        %266 = vmatprep.subr.mxu0 %v203
        %267 = vmatpush1.msra.mxu0 %v202
        %268 = vmatprep.subr.mxu0 %v205
        %269 = vmatpush1.msra.mxu0 %v204
        %270 = vmatprep.subr.mxu0 %v207
        %271 = vmatpush1.msra.mxu0 %v206
        %272 = vmatprep.subr.mxu0 %v209
        %273 = vmatpush1.msra.mxu0 %v208
        %274 = vmatprep.subr.mxu0 %v211
        %275 = vmatpush1.msra.mxu0 %v210
        %276 = vmatprep.subr.mxu0 %v213
        %277 = vmatpush1.msra.mxu0 %v212
        %278 = vmatprep.subr.mxu0 %v215
        %279 = vmatpush1.msra.mxu0 %v214
        %280 = vmatprep.subr.mxu0 %v217
        %281 = vmatpush1.msra.mxu0 %v216
        %282 = vmatprep.subr.mxu0 %v219
        %283 = vmatpush1.msra.mxu0 %v218
        %284 = vmatprep.subr.mxu0 %v221
        %285 = vmatpush1.msra.mxu0 %v220
        %286 = vmatprep.subr.mxu0 %v223
        %287 = vmatpush1.msra.mxu0 %v222
        %288 = vmatprep.subr.mxu0 %v225
        %289 = vmatpush1.msra.mxu0 %v224
        %290 = vmatprep.subr.mxu0 %v227
        %291 = vmatpush1.msra.mxu0 %v226
        %292 = vmatprep.subr.mxu0 %v229
        %293 = vmatpush1.msra.mxu0 %v228
        %294 = vmatprep.subr.mxu0 %v231
        %295 = vmatpush1.msra.mxu0 %v230
        %296 = vmatprep.subr.mxu0 %v233
        %297 = vmatpush1.msra.mxu0 %v232
        %298 = vmatprep.subr.mxu0 %v235
        %299 = vmatpush1.msra.mxu0 %v234
        %300 = vmatprep.subr.mxu0 %v237
        %301 = vmatpush1.msra.mxu0 %v236
        %302 = vmatprep.subr.mxu0 %v239
        %303 = vmatpush1.msra.mxu0 %v238
        %304 = vmatprep.subr.mxu0 %v241
        %305 = vmatpush1.msra.mxu0 %v240
        %306 = vmatprep.subr.mxu0 %v243
        %307 = vmatpush1.msra.mxu0 %v242
        %308 = vmatprep.subr.mxu0 %v245
        %309 = vmatpush1.msra.mxu0 %v244
        %310 = vmatprep.subr.mxu0 %v247
        %311 = vmatpush1.msra.mxu0 %v246
        %312 = vmatprep.subr.mxu0 %v249
        %313 = vmatpush1.msra.mxu0 %v248
        %314 = vmatprep.subr.mxu0 %v251
        %315 = vmatpush1.msra.mxu0 %v250
        %316 = vmatprep.mubr.f32.mxu0 %v181
        %317 = vmatmul.mubr.f32.gmra.mrb[0].mxu0 %v180
        %v318 = vpop.f32.mrb[0].mxu0
        %v319 = vadd.f32 0.0, %v318
        %v320 = vpop.f32.mrb[0].mxu0
        %v321 = vadd.f32 0.0, %v320
        %322 = vmatprep.mubr.f32.mxu0 %v183
        %323 = vmatmul.mubr.f32.gmra.mrb[0].mxu0 %v182
        %v324 = vpop.f32.mrb[0].mxu0
        %v325 = vadd.f32 0.0, %v324
        %v326 = vpop.f32.mrb[0].mxu0
        %v327 = vadd.f32 0.0, %v326
        %328 = vmatprep.mubr.f32.mxu0 %v185
        %329 = vmatmul.mubr.f32.gmra.mrb[0].mxu0 %v184
        %v330 = vpop.f32.mrb[0].mxu0
        %v331 = vadd.f32 0.0, %v330
        %v332 = vpop.f32.mrb[0].mxu0
        %v333 = vadd.f32 0.0, %v332
        %334 = vmatprep.mubr.f32.mxu0 %v187
        %335 = vmatmul.mubr.f32.gmra.mrb[0].mxu0 %v186
        %v336 = vpop.f32.mrb[0].mxu0
        %v337 = vadd.f32 0.0, %v336
        %v338 = vpop.f32.mrb[0].mxu0
        %v339 = vadd.f32 0.0, %v338
        %340 = vdwg.mxu0
        %341 = vst [vmem:[%s177] sm:$0xff] %v319
        %342 = vst [vmem:[%s177 + $0x8] sm:$0xff] %v321
        %343 = vst [vmem:[%s177 + $0x10] sm:$0xff] %v325
        %344 = vst [vmem:[%s177 + $0x18] sm:$0xff] %v327
        %345 = vst [vmem:[%s177 + $0x20] sm:$0xff] %v331
        %346 = vst [vmem:[%s177 + $0x28] sm:$0xff] %v333
        %347 = vst [vmem:[%s177 + $0x30] sm:$0xff] %v337
        %348 = vst [vmem:[%s177 + $0x38] sm:$0xff] %v339
        %s349 = sand.u32 %s75, 1
        %s350 = scalar_lea.sflag [#allocation4], %s349
        %s351 = sand.u32 %s75, 1
        %s352 = smul.addr %s351, 64
        %s353 = scalar_lea.vmem [#allocation7], %s352
        // Predicated region
        $region37: #{tpu_custom_call.1} parent=27 // pred_check
          %p354 = pneg %p85
        $region38: #{tpu_custom_call.1} parent=27 // pred_check_branch
          %356 = sbr.rel (%p354) target = $region40
        $region39: #{tpu_custom_call.1} parent=27 // pred_region
          %s357 = smul.u32 4, %s20
          %s359 = ssub.s32 1024, 1024
          %360 = vsyncadd %s350, %s359
          %s361 = smul.addr %s357, 2
          %s362 = smul.addr %s361, 128
          %s363 = scalar_lea.hbm %s2, %s362
          %s364 = sshll.u32 %s353, 4
          %s365 = int_to_ptr.vmem [resolvable:$true] %s364
          %370 = dma.vmem_to_hbm [thread:$0]  %s365, 1024, %s363, %s350, 256, 256, 16
        $region40: #{tpu_custom_call.1} parent=27 // pred_fallthru
          _
      $region28: #{tpu_custom_call.1} parent=5 // pred_fallthru
        _
      %p371 = scmp.le.s32.totalorder 2, %s15
      // Predicated region
      $region41: #{tpu_custom_call.1} parent=5 // pred_check
        %p372 = pneg %p371
      $region42: #{tpu_custom_call.1} parent=5 // pred_check_branch
        %374 = sbr.rel (%p372) target = $region44
      $region43: #{tpu_custom_call.1} parent=5 // pred_region
        %s375 = ssub.s32 %s15, 2
        // Predicated region
        $region45: #{tpu_custom_call.1} parent=43 // pred_check
          %p376 = pneg %p91
        $region46: #{tpu_custom_call.1} parent=43 // pred_check_branch
          %378 = sbr.rel (%p376) target = $region48
        $region47: #{tpu_custom_call.1} parent=43 // pred_region
          %s379 = sand.u32 %s76, 1
          %s380 = scalar_lea.sflag [#allocation4], %s379
          %s381 = sand.u32 %s76, 1
          %s382 = smul.addr %s381, 64
          %s383 = scalar_lea.vmem [#allocation7], %s382
          %384 = dma.done %s380, 1024
        $region48: #{tpu_custom_call.1} parent=43 // pred_fallthru
          _
      $region44: #{tpu_custom_call.1} parent=5 // pred_fallthru
        _
    $region6: #{tpu_custom_call.1} parent=1 // loop_footer
      %s19 = sadd.s32 1, %s15
    $region7: #{tpu_custom_call.1} parent=1 // loop_footer_branch
      %14 = sbr.rel target = $region3
    $region8: #{tpu_custom_call.1} parent=1 // loop_exit
      _
    %385 = vsyncpa [#allocation3], 1
    %s386 = scalar_lea.sflag [#allocation3], 1
    %387 = vsyncpa %s386, 1
    %388 = vsyncpa [#allocation6], 1
    %389 = vsyncpa [#allocation4], 1
    %s390 = scalar_lea.sflag [#allocation4], 1
    %391 = vsyncpa %s390, 1

</llo_original>
